<compile_context>
chip_gen: v7x
topology: tpu7x:2x2x1
jax: 0.10.0
libtpu: 0.0.40
codegen_flags: <defaults>
</compile_context>

<pallas_src>
import jax
import jax.numpy as jnp
from jax.experimental import pallas as pl
from jax.experimental.pallas import tpu as pltpu


LANE = 128           # lane width: pad D (and adjacency columns) to multiples of this
SUBLANE = 8          # sublane width: pad row tiles to multiples of this
TILE_SMALL_D = 512   # adjacency tile when d_pad <= 256 (amortize per-step overhead)
TILE_LARGE_D = 256   # adjacency tile when d_pad  > 256


def _round_up(x, m):
    return (x + m - 1) // m * m


def _pick_tiles(n, d_pad):
    tile = TILE_SMALL_D if d_pad <= 256 else TILE_LARGE_D
    tm = min(tile, _round_up(max(n, 1), SUBLANE))   # row tile   (mult of 8)
    tn = min(tile, _round_up(max(n, 1), LANE))      # column tile (mult of 128, lane-dense)
    return tm, tn


def _projection_kernel(h_ref, ws_ref, bs_ref, we_ref, states_ref, hw_ref):
    """Grid (i,): per-row-tile projections.  Ws / bs / We stay resident."""
    h = h_ref[...]                                                   # [TM, Dp] bf16
    # generate_states: S = H_i @ Ws + bs  (bf16 MXU, f32 accumulate, f32 bias add)
    states = jnp.dot(h, ws_ref[...], preferred_element_type=jnp.float32)
    states_ref[...] = (states + bs_ref[...]).astype(states_ref.dtype)
    # HW_i = H_i @ We, stored bf16 for the adjacency kernel's MXU pass.
    hw_ref[...] = jnp.dot(h, we_ref[...],
                          preferred_element_type=jnp.float32).astype(hw_ref.dtype)


def _adjacency_kernel(hw_ref, ht_ref, adj_ref):
    """Grid (i, j): A_ij = sigmoid(HW_i @ (H^T)_j).  Both axes independent."""
    scores = jnp.dot(hw_ref[...], ht_ref[...],
                     preferred_element_type=jnp.float32)             # [TM, TN] f32
    # Sigmoid in f32 (v5e has no bf16 EUP); store bf16 to halve the n^2 write stream.
    adj_ref[...] = jax.nn.sigmoid(scores).astype(adj_ref.dtype)


@jax.jit
def _run_generator(h, ws, bs, we):
    n, d = h.shape
    d_pad = _round_up(max(d, 1), LANE)
    tm, tn = _pick_tiles(n, d_pad)
    n_pad_r = _round_up(max(n, 1), tm)     # row padding (states rows / adjacency rows)
    n_pad_c = _round_up(max(n, 1), tn)     # column padding (adjacency columns)

    # Zero-pad to hardware tiles; zero padding leaves the dot products unchanged.
    # MXU operands are cast to bf16; accumulation stays in f32.
    h_rows = jnp.zeros((n_pad_r, d_pad), jnp.float32).at[:n, :d].set(h).astype(jnp.bfloat16)
    h_cols_t = jnp.zeros((d_pad, n_pad_c), jnp.float32).at[:d, :n].set(h.T).astype(jnp.bfloat16)
    ws_p = jnp.zeros((d_pad, d_pad), jnp.float32).at[:d, :d].set(ws).astype(jnp.bfloat16)
    we_p = jnp.zeros((d_pad, d_pad), jnp.float32).at[:d, :d].set(we).astype(jnp.bfloat16)
    bs_p = jnp.zeros((1, d_pad), jnp.float32).at[:, :d].set(bs)      # bias stays f32

    # ---- Kernel A: per-node projections (states = H@Ws + bs, HW = H@We) -------
    states_p, hw_p = pl.pallas_call(
        _projection_kernel,
        out_shape=(
            jax.ShapeDtypeStruct((n_pad_r, d_pad), jnp.float32),     # node states (f32)
            jax.ShapeDtypeStruct((n_pad_r, d_pad), jnp.bfloat16),    # HW intermediate
        ),
        grid=(n_pad_r // tm,),
        in_specs=[
            pl.BlockSpec((tm, d_pad), lambda i: (i, 0)),             # H row tile
            pl.BlockSpec((d_pad, d_pad), lambda i: (0, 0)),          # Ws (resident)
            pl.BlockSpec((1, d_pad), lambda i: (0, 0)),              # bs (resident)
            pl.BlockSpec((d_pad, d_pad), lambda i: (0, 0)),          # We (resident)
        ],
        out_specs=[
            pl.BlockSpec((tm, d_pad), lambda i: (i, 0)),
            pl.BlockSpec((tm, d_pad), lambda i: (i, 0)),
        ],
        compiler_params=pltpu.CompilerParams(
            dimension_semantics=("parallel",),
            vmem_limit_bytes=48 * 1024 * 1024,
        ),
    )(h_rows, ws_p, bs_p, we_p)

    # ---- Kernel B: adjacency tiles A_ij = sigmoid(HW_i @ H_j^T) ---------------
    adj_p = pl.pallas_call(
        _adjacency_kernel,
        out_shape=jax.ShapeDtypeStruct((n_pad_r, n_pad_c), jnp.bfloat16),
        grid=(n_pad_r // tm, n_pad_c // tn),
        in_specs=[
            pl.BlockSpec((tm, d_pad), lambda i, j: (i, 0)),          # HW row tile
            pl.BlockSpec((d_pad, tn), lambda i, j: (0, j)),          # H^T column tile
        ],
        out_specs=pl.BlockSpec((tm, tn), lambda i, j: (i, j)),       # adjacency tile (bf16)
        compiler_params=pltpu.CompilerParams(
            # No cross-iteration state -> both axes can be sharded across cores.
            dimension_semantics=("parallel", "parallel"),
            vmem_limit_bytes=48 * 1024 * 1024,
        ),
    )(hw_p, h_cols_t)

    # Slice padding back off (padded rows carry bs / sigmoid(0) = 0.5 otherwise).
    return states_p[:n, :d], adj_p[:n, :n]


def one_shot_generator_forward(node_names, node_repr, params):
    """JAX/Pallas equivalent of OneShotGenerator.forward.

    node_names: List[str]                  (metadata only — no tensor math)
    node_repr : Dict[str, jnp.ndarray]     one node type -> H [N, D]
    params    : dict with 'Ws' [D,D], 'bs' [1,D], 'We' [D,D]
    returns   : (node_states: Dict[str, Tensor], actions, new_graph [N, N] bf16 probs)
    """
    (ntype, h), = node_repr.items()
    states, adj = _run_generator(h, params["Ws"], params["bs"], params["We"])

    node_states = {ntype: states}
    new_graph = adj
    # graph_to_actions in the reference base class is a no-op (returns None).
    # TODO(synk): concrete subclasses derive add/delete edge actions from the
    # generated graph; that is host-side list bookkeeping, not kernel math.
    actions = None
    return node_states, actions, new_graph


def make_params(d, key):
    """Deterministic synthetic parameters (no checkpoint loading)."""
    k1, k2, k3 = jax.random.split(key, 3)
    return {
        "Ws": jax.random.normal(k1, (d, d), jnp.float32) / jnp.sqrt(d),
        "bs": jax.random.normal(k2, (1, d), jnp.float32) * 0.01,
        "We": jax.random.normal(k3, (d, d), jnp.float32) / jnp.sqrt(d),
    }


if __name__ == "__main__":
    key = jax.random.PRNGKey(0)
    k_h, k_p = jax.random.split(key)

    N, D = 8, 32                                  # 8 nodes, hidden size 32
    node_names = [f"node_{i}@t" for i in range(N)]
    node_repr = {"entity": jax.random.normal(k_h, (N, D), jnp.float32)}
    params = make_params(D, k_p)

    node_states, actions, new_graph = one_shot_generator_forward(
        node_names, node_repr, params)

    jax.block_until_ready((node_states["entity"], new_graph))

    # Correctness check against a plain-JAX reference using the same bf16-quantized
    # MXU operands (f32 accumulation, f32 bias add / sigmoid) as the kernel.
    h = node_repr["entity"]
    hq = h.astype(jnp.bfloat16).astype(jnp.float32)
    wsq = params["Ws"].astype(jnp.bfloat16).astype(jnp.float32)
    weq = params["We"].astype(jnp.bfloat16).astype(jnp.float32)

    ref_states = hq @ wsq + params["bs"]
    hw_q = (hq @ weq).astype(jnp.bfloat16).astype(jnp.float32)
    ref_adj = jax.nn.sigmoid(hw_q @ hq.T)

    assert node_states["entity"].shape == (N, D)
    assert new_graph.shape == (N, N)
    assert jnp.allclose(node_states["entity"], ref_states, atol=1e-2, rtol=1e-2)
    assert jnp.allclose(new_graph.astype(jnp.float32), ref_adj, atol=2e-2, rtol=2e-2)

    print("KERNEL_OK")
</pallas_src>

<mosaic_0001>
module attributes {stable_mosaic.version = 11 : i64} {
  func.func @_adjacency_kernel(%arg0: i32, %arg1: i32, %arg2: memref<8x128xbf16, #tpu.memory_space<vmem>>, %arg3: memref<128x128xbf16, #tpu.memory_space<vmem>>, %arg4: memref<8x128xbf16, #tpu.memory_space<vmem>>) attributes {dimension_semantics = [#tpu.dimension_semantics<parallel>, #tpu.dimension_semantics<parallel>], iteration_bounds = array<i64: 1, 1>, scalar_prefetch = 0 : i64, scratch_operands = 0 : i64, tpu.core_type = #tpu.core_type<tc>, window_params = [{transform_indices = @transform_0, window_bounds = array<i64: 8, 128>}, {transform_indices = @transform_1, window_bounds = array<i64: 128, 128>}, {transform_indices = @transform_2, window_bounds = array<i64: 8, 128>}]} {
    %c0 = arith.constant 0 : index
    %c0_0 = arith.constant 0 : index
    %0 = vector.load %arg2[%c0, %c0_0] : memref<8x128xbf16, #tpu.memory_space<vmem>>, vector<8x128xbf16>
    %c0_1 = arith.constant 0 : index
    %c0_2 = arith.constant 0 : index
    %1 = vector.load %arg3[%c0_1, %c0_2] : memref<128x128xbf16, #tpu.memory_space<vmem>>, vector<128x128xbf16>
    %cst = arith.constant dense<0.000000e+00> : vector<8x128xf32>
    %2 = tpu.matmul %0, %1, %cst {dimension_numbers = #tpu.dot_dimension_numbers<[1], [0], [0], [1], [0, 0, 1, 1], [], []>} : vector<8x128xbf16>, vector<128x128xbf16>, vector<8x128xf32> -> vector<8x128xf32>
    %3 = arith.negf %2 : vector<8x128xf32>
    %4 = math.exp %3 : vector<8x128xf32>
    %cst_3 = arith.constant 1.000000e+00 : f32
    %5 = vector.broadcast %cst_3 : f32 to vector<8x128xf32>
    %6 = arith.addf %5, %4 : vector<8x128xf32>
    %7 = arith.divf %5, %6 : vector<8x128xf32>
    %8 = arith.truncf %7 : vector<8x128xf32> to vector<8x128xbf16>
    %c0_4 = arith.constant 0 : index
    %c0_5 = arith.constant 0 : index
    %9 = vector.load %arg4[%c0_4, %c0_5] : memref<8x128xbf16, #tpu.memory_space<vmem>>, vector<8x128xbf16>
    tpu.vector_store %arg4[%c0_4, %c0_5], %8 {strides = array<i32>} : memref<8x128xbf16, #tpu.memory_space<vmem>>, vector<8x128xbf16>,
    return
  }
  func.func @transform_0(%arg0: i32, %arg1: i32) -> (i32, i32) {
    %c0_i32 = arith.constant 0 : i32
    %c0_i32_0 = arith.constant 0 : i32
    return %arg0, %c0_i32 : i32, i32
  }
  func.func @transform_1(%arg0: i32, %arg1: i32) -> (i32, i32) {
    %c0_i32 = arith.constant 0 : i32
    %c0_i32_0 = arith.constant 0 : i32
    return %c0_i32, %arg1 : i32, i32
  }
  func.func @transform_2(%arg0: i32, %arg1: i32) -> (i32, i32) {
    %c0_i32 = arith.constant 0 : i32
    return %arg0, %arg1 : i32, i32
  }
}

module attributes {stable_mosaic.version = 11 : i64} {
  func.func @_projection_kernel(%arg0: i32, %arg1: memref<8x128xbf16, #tpu.memory_space<vmem>>, %arg2: memref<128x128xbf16, #tpu.memory_space<vmem>>, %arg3: memref<1x128xf32, #tpu.memory_space<vmem>>, %arg4: memref<128x128xbf16, #tpu.memory_space<vmem>>, %arg5: memref<8x128xf32, #tpu.memory_space<vmem>>, %arg6: memref<8x128xbf16, #tpu.memory_space<vmem>>) attributes {dimension_semantics = [#tpu.dimension_semantics<parallel>], iteration_bounds = array<i64: 1>, scalar_prefetch = 0 : i64, scratch_operands = 0 : i64, tpu.core_type = #tpu.core_type<tc>, window_params = [{transform_indices = @transform_0, window_bounds = array<i64: 8, 128>}, {pipeline_mode = #tpu.pipeline_mode<synchronous>, transform_indices = @transform_1, window_bounds = array<i64: 128, 128>}, {pipeline_mode = #tpu.pipeline_mode<synchronous>, transform_indices = @transform_2, window_bounds = array<i64: 1, 128>}, {pipeline_mode = #tpu.pipeline_mode<synchronous>, transform_indices = @transform_3, window_bounds = array<i64: 128, 128>}, {transform_indices = @transform_4, window_bounds = array<i64: 8, 128>}, {transform_indices = @transform_5, window_bounds = array<i64: 8, 128>}]} {
    %c0 = arith.constant 0 : index
    %c0_0 = arith.constant 0 : index
    %0 = vector.load %arg1[%c0, %c0_0] : memref<8x128xbf16, #tpu.memory_space<vmem>>, vector<8x128xbf16>
    %c0_1 = arith.constant 0 : index
    %c0_2 = arith.constant 0 : index
    %1 = vector.load %arg2[%c0_1, %c0_2] : memref<128x128xbf16, #tpu.memory_space<vmem>>, vector<128x128xbf16>
    %cst = arith.constant dense<0.000000e+00> : vector<8x128xf32>
    %2 = tpu.matmul %0, %1, %cst {dimension_numbers = #tpu.dot_dimension_numbers<[1], [0], [0], [1], [0, 0, 1, 1], [], []>} : vector<8x128xbf16>, vector<128x128xbf16>, vector<8x128xf32> -> vector<8x128xf32>
    %c0_3 = arith.constant 0 : index
    %c0_4 = arith.constant 0 : index
    %3 = vector.load %arg3[%c0_3, %c0_4] : memref<1x128xf32, #tpu.memory_space<vmem>>, vector<1x128xf32>
    %4 = vector.broadcast %3 : vector<1x128xf32> to vector<8x128xf32>
    %5 = arith.addf %2, %4 : vector<8x128xf32>
    %c0_5 = arith.constant 0 : index
    %c0_6 = arith.constant 0 : index
    %6 = vector.load %arg5[%c0_5, %c0_6] : memref<8x128xf32, #tpu.memory_space<vmem>>, vector<8x128xf32>
    tpu.vector_store %arg5[%c0_5, %c0_6], %5 {strides = array<i32>} : memref<8x128xf32, #tpu.memory_space<vmem>>, vector<8x128xf32>,
    %c0_7 = arith.constant 0 : index
    %c0_8 = arith.constant 0 : index
    %7 = vector.load %arg4[%c0_7, %c0_8] : memref<128x128xbf16, #tpu.memory_space<vmem>>, vector<128x128xbf16>
    %cst_9 = arith.constant dense<0.000000e+00> : vector<8x128xf32>
    %8 = tpu.matmul %0, %7, %cst_9 {dimension_numbers = #tpu.dot_dimension_numbers<[1], [0], [0], [1], [0, 0, 1, 1], [], []>} : vector<8x128xbf16>, vector<128x128xbf16>, vector<8x128xf32> -> vector<8x128xf32>
    %9 = arith.truncf %8 : vector<8x128xf32> to vector<8x128xbf16>
    %c0_10 = arith.constant 0 : index
    %c0_11 = arith.constant 0 : index
    %10 = vector.load %arg6[%c0_10, %c0_11] : memref<8x128xbf16, #tpu.memory_space<vmem>>, vector<8x128xbf16>
    tpu.vector_store %arg6[%c0_10, %c0_11], %9 {strides = array<i32>} : memref<8x128xbf16, #tpu.memory_space<vmem>>, vector<8x128xbf16>,
    return
  }
  func.func @transform_0(%arg0: i32) -> (i32, i32) {
    %c0_i32 = arith.constant 0 : i32
    %c0_i32_0 = arith.constant 0 : i32
    return %arg0, %c0_i32 : i32, i32
  }
  func.func @transform_1(%arg0: i32) -> (i32, i32) {
    %c0_i32 = arith.constant 0 : i32
    %c0_i32_0 = arith.constant 0 : i32
    %c0_i32_1 = arith.constant 0 : i32
    return %c0_i32, %c0_i32_0 : i32, i32
  }
  func.func @transform_2(%arg0: i32) -> (i32, i32) {
    %c0_i32 = arith.constant 0 : i32
    %c0_i32_0 = arith.constant 0 : i32
    %c0_i32_1 = arith.constant 0 : i32
    return %c0_i32, %c0_i32_0 : i32, i32
  }
  func.func @transform_3(%arg0: i32) -> (i32, i32) {
    %c0_i32 = arith.constant 0 : i32
    %c0_i32_0 = arith.constant 0 : i32
    %c0_i32_1 = arith.constant 0 : i32
    return %c0_i32, %c0_i32_0 : i32, i32
  }
  func.func @transform_4(%arg0: i32) -> (i32, i32) {
    %c0_i32 = arith.constant 0 : i32
    %c0_i32_0 = arith.constant 0 : i32
    return %arg0, %c0_i32 : i32, i32
  }
  func.func @transform_5(%arg0: i32) -> (i32, i32) {
    %c0_i32 = arith.constant 0 : i32
    %c0_i32_0 = arith.constant 0 : i32
    return %arg0, %c0_i32 : i32, i32
  }
}

</mosaic_0001>

<llo_original>
// kernel: _run_generator.3
$region0: #{_run_generator.3}
  #allocation0 [shape = 'u32[]', space=smem, size = 0x4, offset = 0x4, fixed_abs, tag = 'smem constant byte address 0x4 - core index']
  #allocation1 [shape = 'u32[144,128]{1,0:T(1,128)}', space=vmem, size = 0x12000, scoped, tag = 'internal scratch']
  %s0 = inlined_call_operand.vmem [shape: bf16[8,128], index: 0, kind: input, shape index: {}]
  %s1 = inlined_call_operand.vmem [shape: bf16[128,128], index: 1, kind: input, shape index: {}]
  %s2 = inlined_call_operand.hbm [shape: bf16[8,128], index: 2, kind: output, shape index: {}]
  %s3 = sld [smem:[#allocation0]]
  $region18: #{_run_generator.3} parent=0
    _
  %s5 = ssub.s32 1, %s3
  %s6 = scalar_select 0, %s5, %s3
  $region1: #{_run_generator.3} parent=0
    #allocation2 [shape = 'u8[2048]{0}', space=vmem, size = 0x800, scoped, tag = 'output window, operand 0, single buffered']
    #allocation3 [shape = 's32[1]{0}', space=sflag, size = 0x4, scoped, tag = 'scoped memory for _run_generator.3']
    %7 = vsyncpa [#allocation3], 0
    // Predicated region
    $region2: #{_run_generator.3} parent=1 // pred_check
      _
    $region3: #{_run_generator.3} parent=1 // pred_check_branch
      %9 = sbr.rel (0) target = $region5
    $region4: #{_run_generator.3} parent=1 // pred_region
      _
    $region5: #{_run_generator.3} parent=1 // pred_fallthru
      _
    // Predicated region
    $region6: #{_run_generator.3} parent=1 // pred_check
      _
    $region7: #{_run_generator.3} parent=1 // pred_check_branch
      %11 = sbr.rel (0) target = $region9
    $region8: #{_run_generator.3} parent=1 // pred_region
      _
    $region9: #{_run_generator.3} parent=1 // pred_fallthru
      _
    %v13 = vld [vmem:[%s0] sm:$0xf]
    %v14 = vld [vmem:[%s1] sm:$0xf]
    %v15 = vld [vmem:[%s1 + $0x4] sm:$0xf]
    %v16 = vld [vmem:[%s1 + $0x8] sm:$0xf]
    %v17 = vld [vmem:[%s1 + $0xc] sm:$0xf]
    %v18 = vld [vmem:[%s1 + $0x10] sm:$0xf]
    %v19 = vld [vmem:[%s1 + $0x14] sm:$0xf]
    %v20 = vld [vmem:[%s1 + $0x18] sm:$0xf]
    %v21 = vld [vmem:[%s1 + $0x1c] sm:$0xf]
    %v22 = vld [vmem:[%s1 + $0x20] sm:$0xf]
    %v23 = vld [vmem:[%s1 + $0x24] sm:$0xf]
    %v24 = vld [vmem:[%s1 + $0x28] sm:$0xf]
    %v25 = vld [vmem:[%s1 + $0x2c] sm:$0xf]
    %v26 = vld [vmem:[%s1 + $0x30] sm:$0xf]
    %v27 = vld [vmem:[%s1 + $0x34] sm:$0xf]
    %v28 = vld [vmem:[%s1 + $0x38] sm:$0xf]
    %v29 = vld [vmem:[%s1 + $0x3c] sm:$0xf]
    %v46 = vunpack.c.l.b16 %v14
    %v47 = vunpack.c.l.b16 %v15
    %v48 = vunpack.c.l.b16 %v16
    %v49 = vunpack.c.l.b16 %v17
    %v50 = vunpack.c.l.b16 %v18
    %v51 = vunpack.c.l.b16 %v19
    %v52 = vunpack.c.l.b16 %v20
    %v53 = vunpack.c.l.b16 %v21
    %v54 = vunpack.c.l.b16 %v22
    %v55 = vunpack.c.l.b16 %v23
    %v56 = vunpack.c.l.b16 %v24
    %v57 = vunpack.c.l.b16 %v25
    %v58 = vunpack.c.l.b16 %v26
    %v59 = vunpack.c.l.b16 %v27
    %v60 = vunpack.c.l.b16 %v28
    %v61 = vunpack.c.l.b16 %v29
    %v62 = vpack.c.b16 %v47, %v46
    %v63 = vpack.c.b16 %v49, %v48
    %v64 = vpack.c.b16 %v51, %v50
    %v65 = vpack.c.b16 %v53, %v52
    %v66 = vpack.c.b16 %v55, %v54
    %v67 = vpack.c.b16 %v57, %v56
    %v68 = vpack.c.b16 %v59, %v58
    %v69 = vpack.c.b16 %v61, %v60
    %78 = vmatprep.subr.bf16.mxu0 0
    %79 = vmatpush1.bf16.msra.mxu0 %v62
    %80 = vmatprep.subr.bf16.mxu0 0
    %81 = vmatpush1.bf16.msra.mxu0 %v63
    %82 = vmatprep.subr.bf16.mxu0 0
    %83 = vmatpush1.bf16.msra.mxu0 %v64
    %84 = vmatprep.subr.bf16.mxu0 0
    %85 = vmatpush1.bf16.msra.mxu0 %v65
    %86 = vmatprep.subr.bf16.mxu0 0
    %87 = vmatpush1.bf16.msra.mxu0 %v66
    %88 = vmatprep.subr.bf16.mxu0 0
    %89 = vmatpush1.bf16.msra.mxu0 %v67
    %90 = vmatprep.subr.bf16.mxu0 0
    %91 = vmatpush1.bf16.msra.mxu0 %v68
    %92 = vmatprep.subr.bf16.mxu0 0
    %93 = vmatpush1.bf16.msra.mxu0 %v69
    %94 = vmatprep.subr.bf16.mxu0 0
    %95 = vmatpush1.bf16.msra.mxu0 0
    %96 = vmatprep.subr.bf16.mxu0 0
    %97 = vmatpush1.bf16.msra.mxu0 0
    %98 = vmatprep.subr.bf16.mxu0 0
    %99 = vmatpush1.bf16.msra.mxu0 0
    %100 = vmatprep.subr.bf16.mxu0 0
    %101 = vmatpush1.bf16.msra.mxu0 0
    %102 = vmatprep.subr.bf16.mxu0 0
    %103 = vmatpush1.bf16.msra.mxu0 0
    %104 = vmatprep.subr.bf16.mxu0 0
    %105 = vmatpush1.bf16.msra.mxu0 0
    %106 = vmatprep.subr.bf16.mxu0 0
    %107 = vmatpush1.bf16.msra.mxu0 0
    %108 = vmatprep.subr.bf16.mxu0 0
    %109 = vmatpush1.bf16.msra.mxu0 0
    %110 = vmatprep.mubr.bf16.mxu0 0
    %111 = vmatmul.mubr.bf16.gmra.mrb[0].mxu0 %v13
    %v112 = vpop.f32.mrb[0].mxu0
    %v113 = vadd.f32 0.0, %v112
    %v114 = vpop.f32.mrb[0].mxu0
    %v115 = vpop.f32.mrb[0].mxu0
    %v116 = vpop.f32.mrb[0].mxu0
    %117 = vdwg.mxu0
    %v118 = vxor.u32 %v113, 2147483648
    %v119 = vmul.f32 %v118, 1.442695
    %v120 = vpow.pop %v119
    %v121 = vadd.f32 %v120, 1.0
    %v122 = vrcp.pop %v121
    %v123 = vmul.f32 1.0, %v122
    %v124 = vpack.c.bf16 %v123, %v123
    %125 = vst [vmem:[#allocation2] sm:$0xf] %v124
    // Predicated region
    $region10: #{_run_generator.3} parent=1 // pred_check
      _
    $region11: #{_run_generator.3} parent=1 // pred_check_branch
      %127 = sbr.rel (0) target = $region13
    $region12: #{_run_generator.3} parent=1 // pred_region
      %s129 = ssub.s32 64, 64
      %130 = vsyncadd [#allocation3], %s129
      %s132 = sshll.u32 [#allocation2], 4
      %s133 = int_to_ptr.vmem [resolvable:$true] %s132
      %135 = dma.vmem_to_hbm [thread:$0]  %s133, 64, %s2, [#allocation3]
    $region13: #{_run_generator.3} parent=1 // pred_fallthru
      _
    // Predicated region
    $region14: #{_run_generator.3} parent=1 // pred_check
      _
    $region15: #{_run_generator.3} parent=1 // pred_check_branch
      %137 = sbr.rel (0) target = $region17
    $region16: #{_run_generator.3} parent=1 // pred_region
      %138 = dma.done [#allocation3], 64
    $region17: #{_run_generator.3} parent=1 // pred_fallthru
      _
    %139 = vsyncpa [#allocation3], 1

// kernel: _run_generator.2
$region0: #{_run_generator.2}
  #allocation0 [shape = 'u32[]', space=smem, size = 0x4, offset = 0x4, fixed_abs, tag = 'smem constant byte address 0x4 - core index']
  #allocation1 [shape = 'u32[144,128]{1,0:T(1,128)}', space=vmem, size = 0x12000, scoped, tag = 'internal scratch']
  %s0 = inlined_call_operand.vmem [shape: bf16[8,128], index: 0, kind: input, shape index: {}]
  %s1 = inlined_call_operand.vmem [shape: bf16[128,128], index: 1, kind: input, shape index: {}]
  %s2 = inlined_call_operand.vmem [shape: f32[1,128], index: 2, kind: input, shape index: {}]
  %s3 = inlined_call_operand.vmem [shape: bf16[128,128], index: 3, kind: input, shape index: {}]
  %s4 = inlined_call_operand.hbm [shape: f32[8,128], index: 4, kind: output, shape index: {0}]
  %s5 = inlined_call_operand.vmem [shape: bf16[8,128], index: 5, kind: output, shape index: {1}]
  %6 = xla_tuple %s4, %s5
  %s7 = sld [smem:[#allocation0]]
  $region34: #{_run_generator.2} parent=0
    _
  %s9 = ssub.s32 1, %s7
  %s10 = scalar_select 0, %s9, %s7
  $region1: #{_run_generator.2} parent=0
    #allocation2 [shape = 'u8[4096]{0}', space=vmem, size = 0x1000, scoped, tag = 'output window, operand 0, single buffered']
    #allocation3 [shape = 's32[1]{0}', space=sflag, size = 0x4, scoped, tag = 'scoped memory for _run_generator.2']
    %11 = vsyncpa [#allocation3], 0
    // Predicated region
    $region2: #{_run_generator.2} parent=1 // pred_check
      _
    $region3: #{_run_generator.2} parent=1 // pred_check_branch
      %13 = sbr.rel (0) target = $region5
    $region4: #{_run_generator.2} parent=1 // pred_region
      _
    $region5: #{_run_generator.2} parent=1 // pred_fallthru
      _
    // Predicated region
    $region6: #{_run_generator.2} parent=1 // pred_check
      _
    $region7: #{_run_generator.2} parent=1 // pred_check_branch
      %15 = sbr.rel (0) target = $region9
    $region8: #{_run_generator.2} parent=1 // pred_region
      _
    $region9: #{_run_generator.2} parent=1 // pred_fallthru
      _
    // Predicated region
    $region10: #{_run_generator.2} parent=1 // pred_check
      _
    $region11: #{_run_generator.2} parent=1 // pred_check_branch
      %17 = sbr.rel (0) target = $region13
    $region12: #{_run_generator.2} parent=1 // pred_region
      _
    $region13: #{_run_generator.2} parent=1 // pred_fallthru
      _
    // Predicated region
    $region14: #{_run_generator.2} parent=1 // pred_check
      _
    $region15: #{_run_generator.2} parent=1 // pred_check_branch
      %19 = sbr.rel (0) target = $region17
    $region16: #{_run_generator.2} parent=1 // pred_region
      _
    $region17: #{_run_generator.2} parent=1 // pred_fallthru
      _
    %v21 = vld [vmem:[%s0] sm:$0xf]
    %v22 = vld [vmem:[%s1] sm:$0xf]
    %v23 = vld [vmem:[%s1 + $0x4] sm:$0xf]
    %v24 = vld [vmem:[%s1 + $0x8] sm:$0xf]
    %v25 = vld [vmem:[%s1 + $0xc] sm:$0xf]
    %v26 = vld [vmem:[%s1 + $0x10] sm:$0xf]
    %v27 = vld [vmem:[%s1 + $0x14] sm:$0xf]
    %v28 = vld [vmem:[%s1 + $0x18] sm:$0xf]
    %v29 = vld [vmem:[%s1 + $0x1c] sm:$0xf]
    %v30 = vld [vmem:[%s1 + $0x20] sm:$0xf]
    %v31 = vld [vmem:[%s1 + $0x24] sm:$0xf]
    %v32 = vld [vmem:[%s1 + $0x28] sm:$0xf]
    %v33 = vld [vmem:[%s1 + $0x2c] sm:$0xf]
    %v34 = vld [vmem:[%s1 + $0x30] sm:$0xf]
    %v35 = vld [vmem:[%s1 + $0x34] sm:$0xf]
    %v36 = vld [vmem:[%s1 + $0x38] sm:$0xf]
    %v37 = vld [vmem:[%s1 + $0x3c] sm:$0xf]
    %v38 = vld [vmem:[%s2] sm:$0x1]
    %v40 = vlaneseq
    %v41 = vshrl.u32 %v40, 7
    %v42 = vsub.s32 0, %v41
    %v43 = vrot.slane %v38, %v42
    %v61 = vunpack.c.l.b16 %v22
    %v62 = vunpack.c.l.b16 %v23
    %v63 = vunpack.c.l.b16 %v24
    %v64 = vunpack.c.l.b16 %v25
    %v65 = vunpack.c.l.b16 %v26
    %v66 = vunpack.c.l.b16 %v27
    %v67 = vunpack.c.l.b16 %v28
    %v68 = vunpack.c.l.b16 %v29
    %v69 = vunpack.c.l.b16 %v30
    %v70 = vunpack.c.l.b16 %v31
    %v71 = vunpack.c.l.b16 %v32
    %v72 = vunpack.c.l.b16 %v33
    %v73 = vunpack.c.l.b16 %v34
    %v74 = vunpack.c.l.b16 %v35
    %v75 = vunpack.c.l.b16 %v36
    %v76 = vunpack.c.l.b16 %v37
    %v77 = vpack.c.b16 %v62, %v61
    %v78 = vpack.c.b16 %v64, %v63
    %v79 = vpack.c.b16 %v66, %v65
    %v80 = vpack.c.b16 %v68, %v67
    %v81 = vpack.c.b16 %v70, %v69
    %v82 = vpack.c.b16 %v72, %v71
    %v83 = vpack.c.b16 %v74, %v73
    %v84 = vpack.c.b16 %v76, %v75
    %93 = vmatprep.subr.bf16.mxu0 0
    %94 = vmatpush1.bf16.msra.mxu0 %v77
    %95 = vmatprep.subr.bf16.mxu0 0
    %96 = vmatpush1.bf16.msra.mxu0 %v78
    %97 = vmatprep.subr.bf16.mxu0 0
    %98 = vmatpush1.bf16.msra.mxu0 %v79
    %99 = vmatprep.subr.bf16.mxu0 0
    %100 = vmatpush1.bf16.msra.mxu0 %v80
    %101 = vmatprep.subr.bf16.mxu0 0
    %102 = vmatpush1.bf16.msra.mxu0 %v81
    %103 = vmatprep.subr.bf16.mxu0 0
    %104 = vmatpush1.bf16.msra.mxu0 %v82
    %105 = vmatprep.subr.bf16.mxu0 0
    %106 = vmatpush1.bf16.msra.mxu0 %v83
    %107 = vmatprep.subr.bf16.mxu0 0
    %108 = vmatpush1.bf16.msra.mxu0 %v84
    %109 = vmatprep.subr.bf16.mxu0 0
    %110 = vmatpush1.bf16.msra.mxu0 0
    %111 = vmatprep.subr.bf16.mxu0 0
    %112 = vmatpush1.bf16.msra.mxu0 0
    %113 = vmatprep.subr.bf16.mxu0 0
    %114 = vmatpush1.bf16.msra.mxu0 0
    %115 = vmatprep.subr.bf16.mxu0 0
    %116 = vmatpush1.bf16.msra.mxu0 0
    %117 = vmatprep.subr.bf16.mxu0 0
    %118 = vmatpush1.bf16.msra.mxu0 0
    %119 = vmatprep.subr.bf16.mxu0 0
    %120 = vmatpush1.bf16.msra.mxu0 0
    %121 = vmatprep.subr.bf16.mxu0 0
    %122 = vmatpush1.bf16.msra.mxu0 0
    %123 = vmatprep.subr.bf16.mxu0 0
    %124 = vmatpush1.bf16.msra.mxu0 0
    %125 = vmatprep.mubr.bf16.mxu0 0
    %126 = vmatmul.mubr.bf16.gmra.mrb[0].mxu0 %v21
    %v127 = vpop.f32.mrb[0].mxu0
    %v128 = vadd.f32 %v43, %v127
    %v129 = vpop.f32.mrb[0].mxu0
    %v130 = vpop.f32.mrb[0].mxu0
    %v131 = vpop.f32.mrb[0].mxu0
    %132 = vdwg.mxu0
    %133 = vst [vmem:[#allocation2] sm:$0xff] %v128
    %v134 = vld [vmem:[%s3] sm:$0xf]
    %v135 = vld [vmem:[%s3 + $0x4] sm:$0xf]
    %v136 = vld [vmem:[%s3 + $0x8] sm:$0xf]
    %v137 = vld [vmem:[%s3 + $0xc] sm:$0xf]
    %v138 = vld [vmem:[%s3 + $0x10] sm:$0xf]
    %v139 = vld [vmem:[%s3 + $0x14] sm:$0xf]
    %v140 = vld [vmem:[%s3 + $0x18] sm:$0xf]
    %v141 = vld [vmem:[%s3 + $0x1c] sm:$0xf]
    %v142 = vld [vmem:[%s3 + $0x20] sm:$0xf]
    %v143 = vld [vmem:[%s3 + $0x24] sm:$0xf]
    %v144 = vld [vmem:[%s3 + $0x28] sm:$0xf]
    %v145 = vld [vmem:[%s3 + $0x2c] sm:$0xf]
    %v146 = vld [vmem:[%s3 + $0x30] sm:$0xf]
    %v147 = vld [vmem:[%s3 + $0x34] sm:$0xf]
    %v148 = vld [vmem:[%s3 + $0x38] sm:$0xf]
    %v149 = vld [vmem:[%s3 + $0x3c] sm:$0xf]
    %v166 = vunpack.c.l.b16 %v134
    %v167 = vunpack.c.l.b16 %v135
    %v168 = vunpack.c.l.b16 %v136
    %v169 = vunpack.c.l.b16 %v137
    %v170 = vunpack.c.l.b16 %v138
    %v171 = vunpack.c.l.b16 %v139
    %v172 = vunpack.c.l.b16 %v140
    %v173 = vunpack.c.l.b16 %v141
    %v174 = vunpack.c.l.b16 %v142
    %v175 = vunpack.c.l.b16 %v143
    %v176 = vunpack.c.l.b16 %v144
    %v177 = vunpack.c.l.b16 %v145
    %v178 = vunpack.c.l.b16 %v146
    %v179 = vunpack.c.l.b16 %v147
    %v180 = vunpack.c.l.b16 %v148
    %v181 = vunpack.c.l.b16 %v149
    %v182 = vpack.c.b16 %v167, %v166
    %v183 = vpack.c.b16 %v169, %v168
    %v184 = vpack.c.b16 %v171, %v170
    %v185 = vpack.c.b16 %v173, %v172
    %v186 = vpack.c.b16 %v175, %v174
    %v187 = vpack.c.b16 %v177, %v176
    %v188 = vpack.c.b16 %v179, %v178
    %v189 = vpack.c.b16 %v181, %v180
    %198 = vmatprep.subr.bf16.mxu0 0
    %199 = vmatpush1.bf16.msra.mxu0 %v182
    %200 = vmatprep.subr.bf16.mxu0 0
    %201 = vmatpush1.bf16.msra.mxu0 %v183
    %202 = vmatprep.subr.bf16.mxu0 0
    %203 = vmatpush1.bf16.msra.mxu0 %v184
    %204 = vmatprep.subr.bf16.mxu0 0
    %205 = vmatpush1.bf16.msra.mxu0 %v185
    %206 = vmatprep.subr.bf16.mxu0 0
    %207 = vmatpush1.bf16.msra.mxu0 %v186
    %208 = vmatprep.subr.bf16.mxu0 0
    %209 = vmatpush1.bf16.msra.mxu0 %v187
    %210 = vmatprep.subr.bf16.mxu0 0
    %211 = vmatpush1.bf16.msra.mxu0 %v188
    %212 = vmatprep.subr.bf16.mxu0 0
    %213 = vmatpush1.bf16.msra.mxu0 %v189
    %214 = vmatprep.subr.bf16.mxu0 0
    %215 = vmatpush1.bf16.msra.mxu0 0
    %216 = vmatprep.subr.bf16.mxu0 0
    %217 = vmatpush1.bf16.msra.mxu0 0
    %218 = vmatprep.subr.bf16.mxu0 0
    %219 = vmatpush1.bf16.msra.mxu0 0
    %220 = vmatprep.subr.bf16.mxu0 0
    %221 = vmatpush1.bf16.msra.mxu0 0
    %222 = vmatprep.subr.bf16.mxu0 0
    %223 = vmatpush1.bf16.msra.mxu0 0
    %224 = vmatprep.subr.bf16.mxu0 0
    %225 = vmatpush1.bf16.msra.mxu0 0
    %226 = vmatprep.subr.bf16.mxu0 0
    %227 = vmatpush1.bf16.msra.mxu0 0
    %228 = vmatprep.subr.bf16.mxu0 0
    %229 = vmatpush1.bf16.msra.mxu0 0
    %230 = vmatprep.mubr.bf16.mxu0 0
    %231 = vmatmul.mubr.bf16.gmra.mrb[0].mxu0 %v21
    %v232 = vpop.f32.mrb[0].mxu0
    %v233 = vadd.f32 0.0, %v232
    %v234 = vpop.f32.mrb[0].mxu0
    %v235 = vpop.f32.mrb[0].mxu0
    %v236 = vpop.f32.mrb[0].mxu0
    %237 = vdwg.mxu0
    %v238 = vpack.c.bf16 %v233, %v233
    %239 = vst [vmem:[%s5] sm:$0xf] %v238
    // Predicated region
    $region18: #{_run_generator.2} parent=1 // pred_check
      _
    $region19: #{_run_generator.2} parent=1 // pred_check_branch
      %241 = sbr.rel (0) target = $region21
    $region20: #{_run_generator.2} parent=1 // pred_region
      %s243 = ssub.s32 128, 128
      %244 = vsyncadd [#allocation3], %s243
      %s246 = sshll.u32 [#allocation2], 4
      %s247 = int_to_ptr.vmem [resolvable:$true] %s246
      %249 = dma.vmem_to_hbm [thread:$0]  %s247, 128, %s4, [#allocation3]
    $region21: #{_run_generator.2} parent=1 // pred_fallthru
      _
    // Predicated region
    $region22: #{_run_generator.2} parent=1 // pred_check
      _
    $region23: #{_run_generator.2} parent=1 // pred_check_branch
      %251 = sbr.rel (0) target = $region25
    $region24: #{_run_generator.2} parent=1 // pred_region
      _
    $region25: #{_run_generator.2} parent=1 // pred_fallthru
      _
    // Predicated region
    $region26: #{_run_generator.2} parent=1 // pred_check
      _
    $region27: #{_run_generator.2} parent=1 // pred_check_branch
      %253 = sbr.rel (0) target = $region29
    $region28: #{_run_generator.2} parent=1 // pred_region
      %254 = dma.done [#allocation3], 128
    $region29: #{_run_generator.2} parent=1 // pred_fallthru
      _
    // Predicated region
    $region30: #{_run_generator.2} parent=1 // pred_check
      _
    $region31: #{_run_generator.2} parent=1 // pred_check_branch
      %256 = sbr.rel (0) target = $region33
    $region32: #{_run_generator.2} parent=1 // pred_region
      _
    $region33: #{_run_generator.2} parent=1 // pred_fallthru
      _
    %257 = vsyncpa [#allocation3], 1

</llo_original>
